<compile_context>
chip_gen: v7x
topology: tpu7x:2x2x1
jax: 0.10.0
libtpu: 0.0.40
codegen_flags: <defaults>
</compile_context>

<pallas_src>
import math

import jax
import jax.numpy as jnp
from jax.experimental import pallas as pl
from jax.experimental.pallas import tpu as pltpu


def make_pe_table(d_model: int, max_len: int = 5000) -> jnp.ndarray:
    """Deterministic sinusoidal PE table, identical to the PyTorch __init__."""
    position = jnp.arange(0, max_len, dtype=jnp.float32)[:, None]            # (max_len, 1)
    div_term = jnp.exp(
        jnp.arange(0, d_model, 2, dtype=jnp.float32) * (-math.log(10000.0) / d_model)
    )                                                                          # (d_model//2,)
    angles = position * div_term                                               # (max_len, d_model//2)
    pe = jnp.zeros((max_len, d_model), dtype=jnp.float32)
    pe = pe.at[:, 0::2].set(jnp.sin(angles))
    pe = pe.at[:, 1::2].set(jnp.cos(angles))
    return pe                                                                  # (max_len, d_model)


def _pe_add_kernel(x_ref, pe_ref, o_ref):
    # Main path:     x_ref (TS, D), pe_ref (TS, D)          -> same-shape add.
    # Fallback path: x_ref (B, TF), pe_ref (1, TF)          -> sublane broadcast.
    o_ref[...] = x_ref[...] + pe_ref[...]


_TARGET_TILE_BYTES = 2 * 1024 * 1024  # ~2 MiB per tile buffer (safe on v5e/v6e/v7x)


def positional_encoding_forward(x: jnp.ndarray, pe_full: jnp.ndarray) -> jnp.ndarray:
    """Equivalent of PositionalEncoding.forward: x + pe[:, :x.shape[1], :]."""
    B, S, D = x.shape
    assert S <= pe_full.shape[0], "sequence length exceeds max_len of PE table"

    pe_slice = pe_full[:S, :].astype(x.dtype)  # match activation dtype (halves PE DMA for bf16)
    itemsize = jnp.dtype(x.dtype).itemsize

    cost = pl.CostEstimate(
        flops=B * S * D,
        transcendentals=0,
        bytes_accessed=2 * B * S * D * itemsize + S * D * itemsize,
    )

    if D % 128 == 0:
        # Lane-dense 3D path: tile the sequence dimension, keep PE resident
        # across the inner batch loop.
        ts = (_TARGET_TILE_BYTES // (D * itemsize)) // 8 * 8
        ts = max(8, ts)
        ts = min(S, ts)  # if ts == S the block equals the full dim (always legal)
        grid = (pl.cdiv(S, ts), B)

        return pl.pallas_call(
            _pe_add_kernel,
            out_shape=jax.ShapeDtypeStruct((B, S, D), x.dtype),
            grid_spec=pltpu.PrefetchScalarGridSpec(
                num_scalar_prefetch=0,
                grid=grid,
                in_specs=[
                    pl.BlockSpec((pl.Squeezed(), ts, D), lambda s, b: (b, s, 0)),
                    pl.BlockSpec((ts, D), lambda s, b: (s, 0)),  # depends only on s -> stays resident over b
                ],
                out_specs=pl.BlockSpec((pl.Squeezed(), ts, D), lambda s, b: (b, s, 0)),
            ),
            compiler_params=pltpu.CompilerParams(
                dimension_semantics=("parallel", "parallel"),
            ),
            cost_estimate=cost,
        )(x, pe_slice)

    # Small-D fallback: flatten (S, D) -> (S*D,) so the last dim presented to
    # the kernel is lane-dense (avoids masked partial stores for D < 128).
    F = S * D
    x2 = x.reshape(B, F)
    pe2 = pe_slice.reshape(1, F)

    if F % 128 == 0:
        tf = (_TARGET_TILE_BYTES // itemsize) // 128 * 128
        tf = max(128, tf)
        tf = min(F, tf)
    else:
        tf = F  # must use the full dim when no 128-multiple tiling is possible
    grid = (pl.cdiv(F, tf),)

    out2 = pl.pallas_call(
        _pe_add_kernel,
        out_shape=jax.ShapeDtypeStruct((B, F), x.dtype),
        grid_spec=pltpu.PrefetchScalarGridSpec(
            num_scalar_prefetch=0,
            grid=grid,
            in_specs=[
                pl.BlockSpec((B, tf), lambda f: (0, f)),
                pl.BlockSpec((1, tf), lambda f: (0, f)),
            ],
            out_specs=pl.BlockSpec((B, tf), lambda f: (0, f)),
        ),
        compiler_params=pltpu.CompilerParams(
            dimension_semantics=("parallel",),
        ),
        cost_estimate=cost,
    )(x2, pe2)
    return out2.reshape(B, S, D)


if __name__ == "__main__":
    MAX_LEN = 5000
    key = jax.random.PRNGKey(0)
    k1, k2 = jax.random.split(key)

    # Case 1: small D (module's demo-sized shapes) -> exercises the
    # lane-dense flattened fallback path.
    B, S, D = 2, 8, 32
    x = jax.random.normal(k1, (B, S, D), dtype=jnp.float32)
    pe_full = make_pe_table(D, MAX_LEN)
    out = jax.block_until_ready(positional_encoding_forward(x, pe_full))
    ref = x + pe_full[None, :S, :]
    assert out.shape == (B, S, D)
    assert jnp.allclose(out, ref, atol=1e-6), "mismatch vs reference (small-D path)"

    # Case 2: lane-dense d_model -> exercises the main S-tiled 3D path.
    B2, S2, D2 = 2, 16, 128
    x2 = jax.random.normal(k2, (B2, S2, D2), dtype=jnp.float32)
    pe_full2 = make_pe_table(D2, MAX_LEN)
    out2 = jax.block_until_ready(positional_encoding_forward(x2, pe_full2))
    ref2 = x2 + pe_full2[None, :S2, :]
    assert out2.shape == (B2, S2, D2)
    assert jnp.allclose(out2, ref2, atol=1e-6), "mismatch vs reference (lane-dense path)"

    print("KERNEL_OK")
</pallas_src>

<mosaic_0001>
module attributes {stable_mosaic.version = 11 : i64} {
  func.func @_pe_add_kernel(%arg0: i32, %arg1: memref<2x256xf32, #tpu.memory_space<vmem>>, %arg2: memref<1x256xf32, #tpu.memory_space<vmem>>, %arg3: memref<2x256xf32, #tpu.memory_space<vmem>>) attributes {dimension_semantics = [#tpu.dimension_semantics<parallel>], iteration_bounds = array<i64: 1>, scalar_prefetch = 0 : i64, scratch_operands = 0 : i64, tpu.core_type = #tpu.core_type<tc>, window_params = [{transform_indices = @transform_0, window_bounds = array<i64: 2, 256>}, {transform_indices = @transform_1, window_bounds = array<i64: 1, 256>}, {transform_indices = @transform_2, window_bounds = array<i64: 2, 256>}]} {
    %c0 = arith.constant 0 : index
    %c0_0 = arith.constant 0 : index
    %0 = vector.load %arg1[%c0, %c0_0] : memref<2x256xf32, #tpu.memory_space<vmem>>, vector<2x256xf32>
    %c0_1 = arith.constant 0 : index
    %c0_2 = arith.constant 0 : index
    %1 = vector.load %arg2[%c0_1, %c0_2] : memref<1x256xf32, #tpu.memory_space<vmem>>, vector<1x256xf32>
    %2 = vector.broadcast %1 : vector<1x256xf32> to vector<2x256xf32>
    %3 = arith.addf %0, %2 : vector<2x256xf32>
    %c0_3 = arith.constant 0 : index
    %c0_4 = arith.constant 0 : index
    %4 = vector.load %arg3[%c0_3, %c0_4] : memref<2x256xf32, #tpu.memory_space<vmem>>, vector<2x256xf32>
    tpu.vector_store %arg3[%c0_3, %c0_4], %3 {strides = array<i32>} : memref<2x256xf32, #tpu.memory_space<vmem>>, vector<2x256xf32>,
    return
  }
  func.func @transform_0(%arg0: i32) -> (i32, i32) {
    %c0_i32 = arith.constant 0 : i32
    %c0_i32_0 = arith.constant 0 : i32
    return %c0_i32, %arg0 : i32, i32
  }
  func.func @transform_1(%arg0: i32) -> (i32, i32) {
    %c0_i32 = arith.constant 0 : i32
    %c0_i32_0 = arith.constant 0 : i32
    return %c0_i32, %arg0 : i32, i32
  }
  func.func @transform_2(%arg0: i32) -> (i32, i32) {
    %c0_i32 = arith.constant 0 : i32
    %c0_i32_0 = arith.constant 0 : i32
    return %c0_i32, %arg0 : i32, i32
  }
}

</mosaic_0001>

<llo_original>
// kernel: tpu_custom_call.1
$region0: #{tpu_custom_call.1}
  #allocation0 [shape = 'u32[]', space=smem, size = 0x4, offset = 0x4, fixed_abs, tag = 'smem constant byte address 0x4 - core index']
  #allocation1 [shape = 'u32[144,128]{1,0:T(1,128)}', space=vmem, size = 0x12000, scoped, tag = 'internal scratch']
  %s0 = inlined_call_operand.hbm [shape: f32[2,256], index: 0, kind: input, shape index: {}]
  %s1 = inlined_call_operand.vmem [shape: f32[1,256], index: 1, kind: input, shape index: {}]
  %s2 = inlined_call_operand.hbm [shape: f32[2,256], index: 2, kind: output, shape index: {}]
  %s3 = sld [smem:[#allocation0]]
  $region22: #{tpu_custom_call.1} parent=0
    _
  %s5 = ssub.s32 1, %s3
  %s6 = scalar_select 0, %s5, %s3
  $region1: #{tpu_custom_call.1} parent=0
    #allocation2 [shape = 'u8[2048]{0}', space=vmem, size = 0x800, scoped, tag = 'input window, operand 0, single buffered']
    #allocation3 [shape = 's32[1]{0}', space=sflag, size = 0x4, scoped, tag = 'scoped memory for tpu_custom_call.1']
    #allocation4 [shape = 's32[1]{0}', space=sflag, size = 0x4, scoped, tag = 'scoped memory for tpu_custom_call.1']
    #allocation5 [shape = 'u8[2048]{0}', space=vmem, size = 0x800, scoped, tag = 'output window, operand 0, single buffered']
    %7 = vsyncpa [#allocation3], 0
    %8 = vsyncpa [#allocation4], 0
    // Predicated region
    $region2: #{tpu_custom_call.1} parent=1 // pred_check
      _
    $region3: #{tpu_custom_call.1} parent=1 // pred_check_branch
      %10 = sbr.rel (0) target = $region5
    $region4: #{tpu_custom_call.1} parent=1 // pred_region
      %s12 = ssub.s32 64, 64
      %13 = vsyncadd [#allocation3], %s12
      %s15 = sshll.u32 [#allocation2], 4
      %s16 = int_to_ptr.vmem [resolvable:$true] %s15
      %18 = dma.hbm_to_vmem [thread:$0]  %s0, 64, %s16, [#allocation3]
    $region5: #{tpu_custom_call.1} parent=1 // pred_fallthru
      _
    // Predicated region
    $region6: #{tpu_custom_call.1} parent=1 // pred_check
      _
    $region7: #{tpu_custom_call.1} parent=1 // pred_check_branch
      %20 = sbr.rel (0) target = $region9
    $region8: #{tpu_custom_call.1} parent=1 // pred_region
      _
    $region9: #{tpu_custom_call.1} parent=1 // pred_fallthru
      _
    // Predicated region
    $region10: #{tpu_custom_call.1} parent=1 // pred_check
      _
    $region11: #{tpu_custom_call.1} parent=1 // pred_check_branch
      %22 = sbr.rel (0) target = $region13
    $region12: #{tpu_custom_call.1} parent=1 // pred_region
      %23 = dma.done [#allocation3], 64
    $region13: #{tpu_custom_call.1} parent=1 // pred_fallthru
      _
    %v24 = vld [vmem:[#allocation2] sm:$0xf]
    %v25 = vld [vmem:[%s1] sm:$0x3]
    %v27 = vlaneseq
    %v28 = vshrl.u32 %v27, 7
    %v29 = vsub.s32 0, %v28
    %v30 = vrot.slane %v25, %v29
    %v31 = vlaneseq
    %v32 = vshrl.u32 %v31, 7
    %v33 = vsub.s32 1, %v32
    %v34 = vrot.slane %v25, %v33
    %v35 = vcombine.low %v30, %v34
    %v37 = vunpack.c.l.s4 1983009808
    %v38 = vunpack.c.0.s8 %v37
    %v39 = vlaneseq
    %v40 = vshrl.u32 %v39, 7
    %v41 = vsub.s32 %v38, %v40
    %v42 = vrot.slane %v35, %v41
    %v44 = vadd.f32 %v24, %v42
    %45 = vst [vmem:[#allocation5] sm:$0xf] %v44
    // Predicated region
    $region14: #{tpu_custom_call.1} parent=1 // pred_check
      _
    $region15: #{tpu_custom_call.1} parent=1 // pred_check_branch
      %47 = sbr.rel (0) target = $region17
    $region16: #{tpu_custom_call.1} parent=1 // pred_region
      %s49 = ssub.s32 64, 64
      %50 = vsyncadd [#allocation4], %s49
      %s52 = sshll.u32 [#allocation5], 4
      %s53 = int_to_ptr.vmem [resolvable:$true] %s52
      %55 = dma.vmem_to_hbm [thread:$0]  %s53, 64, %s2, [#allocation4]
    $region17: #{tpu_custom_call.1} parent=1 // pred_fallthru
      _
    // Predicated region
    $region18: #{tpu_custom_call.1} parent=1 // pred_check
      _
    $region19: #{tpu_custom_call.1} parent=1 // pred_check_branch
      %57 = sbr.rel (0) target = $region21
    $region20: #{tpu_custom_call.1} parent=1 // pred_region
      %58 = dma.done [#allocation4], 64
    $region21: #{tpu_custom_call.1} parent=1 // pred_fallthru
      _
    %59 = vsyncpa [#allocation3], 1
    %60 = vsyncpa [#allocation4], 1

</llo_original>
